<compile_context>
chip_gen: v7x
topology: tpu7x:2x2x1
jax: 0.10.0
libtpu: 0.0.40
codegen_flags: <defaults>
</compile_context>

<pallas_src>
import jax
import jax.numpy as jnp
import numpy as np
from jax.experimental import pallas as pl
from jax.experimental.pallas import tpu as pltpu


def attention_kernel(seq_p_ref, seq_g_ref, seq_gt_ref, w_ref, out_ref):
    seq_p = seq_p_ref[...]      # (Lp, Ep) f32, feature dim zero-padded to lanes
    seq_g = seq_g_ref[...]      # (Lg, Ep) f32
    seq_gt = seq_gt_ref[...]    # (Ep, Lg) f32 (pre-transposed in the wrapper)
    w = w_ref[...]              # (Ep, Ep) f32
    Lg = seq_g.shape[0]
    Ep = seq_p.shape[1]

    # A = tanh((seq_p @ W) @ seq_g^T) -- both matmuls are plain (M,K)@(K,N)
    # MXU pushes, no in-kernel transpose / dot_general relayout.
    o1 = jnp.dot(seq_p, w, preferred_element_type=jnp.float32)       # (Lp, Ep)
    scores = jnp.dot(o1, seq_gt, preferred_element_type=jnp.float32)  # (Lp, Lg)
    a = jnp.tanh(scores)

    # tp = softmax over Lp of row-max(A)  -> (Lp, 1), sublane-oriented.
    tp = jnp.max(a, axis=1, keepdims=True)
    tp_e = jnp.exp(tp - jnp.max(tp, axis=0, keepdims=True))
    tp_s = tp_e / jnp.sum(tp_e, axis=0, keepdims=True)

    # tg = softmax over Lg of col-max(A)  -> (1, Lg), lane-oriented.
    tg = jnp.max(a, axis=0, keepdims=True)
    tg_e = jnp.exp(tg - jnp.max(tg, axis=1, keepdims=True))
    tg_s = tg_e / jnp.sum(tg_e, axis=1, keepdims=True)

    # Relayout tg_s (1, Lg) lanes -> (Lg, 1) sublanes via broadcast + diagonal
    # select + lane reduce (pure VPU/XLU; cheap while Lg <= one vreg).
    sub_ids = jax.lax.broadcasted_iota(jnp.int32, (Lg, Lg), 0)
    lane_ids = jax.lax.broadcasted_iota(jnp.int32, (Lg, Lg), 1)
    tg_col = jnp.sum(jnp.where(sub_ids == lane_ids, tg_s, 0.0),
                     axis=1, keepdims=True)                           # (Lg, 1)

    # Weighted sums on the VPU: broadcast-mul + sublane reduce.
    v_p = jnp.sum(tp_s * seq_p, axis=0, keepdims=True)                # (1, Ep)
    v_g = jnp.sum(tg_col * seq_g, axis=0, keepdims=True)              # (1, Ep)

    # Single lane-dense output slab: row 0 = v_p, row 1 = v_g, rows 2..7 zero.
    row_ids = jax.lax.broadcasted_iota(jnp.int32, (out_ref.shape[0], Ep), 0)
    slab = jnp.where(row_ids == 0, v_p, jnp.where(row_ids == 1, v_g, 0.0))
    out_ref[...] = slab.astype(out_ref.dtype)


def _padded_dim(e):
    return ((e + 127) // 128) * 128


def prepare_atten_weight(atten_weight):
    """Pad W to the 128-lane vreg width ONCE (hoisted out of the forward path).

    Exact: padded rows/columns are zero, so the extra contraction terms vanish.
    NOTE: callers must not pass a pre-padded W with garbage in the pad region.
    """
    E = atten_weight.shape[0]
    pad = _padded_dim(E) - E
    return jnp.pad(atten_weight.astype(jnp.float32), ((0, pad), (0, pad)))


@jax.jit
def attention_forward(seq_p, seq_g, w_padded):
    """Forward pass. `w_padded` is the output of prepare_atten_weight."""
    Lp, E = seq_p.shape
    Lg, Eg = seq_g.shape
    Ep = w_padded.shape[0]
    assert Eg == E and w_padded.shape == (Ep, Ep) and Ep >= E

    pad = Ep - E
    # Zero-pad the feature dim up to the 128-lane vreg width (lane-dense
    # loads / VPU work). These pads + the transpose fuse under jit.
    seq_p_p = jnp.pad(seq_p.astype(jnp.float32), ((0, 0), (0, pad)))
    seq_g_p = jnp.pad(seq_g.astype(jnp.float32), ((0, 0), (0, pad)))
    seq_gt_p = seq_g_p.T                       # (Ep, Lg) MXU-native RHS layout

    # No grid: everything fits comfortably in VMEM at this size; whole arrays
    # are mapped straight in (no per-step grid overhead).
    out = pl.pallas_call(
        attention_kernel,
        out_shape=jax.ShapeDtypeStruct((8, Ep), jnp.float32),
        in_specs=[
            pl.BlockSpec(memory_space=pltpu.MemorySpace.VMEM),
            pl.BlockSpec(memory_space=pltpu.MemorySpace.VMEM),
            pl.BlockSpec(memory_space=pltpu.MemorySpace.VMEM),
            pl.BlockSpec(memory_space=pltpu.MemorySpace.VMEM),
        ],
        out_specs=pl.BlockSpec(memory_space=pltpu.MemorySpace.VMEM),
    )(seq_p_p, seq_g_p, seq_gt_p, w_padded)

    v_p = out[0:1, :E]
    v_g = out[1:2, :E]
    return v_p, v_g


def init_atten_weight(key, embedding_size):
    # nn.init.xavier_uniform_ with gain=sqrt(2.0):
    # bound = gain * sqrt(6 / (fan_in + fan_out))
    gain = np.sqrt(2.0)
    bound = gain * np.sqrt(6.0 / (embedding_size + embedding_size))
    return jax.random.uniform(
        key, (embedding_size, embedding_size),
        dtype=jnp.float32, minval=-bound, maxval=bound,
    )


def reference_forward(seq_p, seq_g, w):
    a = jnp.tanh((seq_p @ w) @ seq_g.T)
    tp = jnp.max(a, axis=1)
    tg = jnp.max(a, axis=0)
    tp_s = jax.nn.softmax(tp)[None, :]
    tg_s = jax.nn.softmax(tg)[None, :]
    return tp_s @ seq_p, tg_s @ seq_g


if __name__ == "__main__":
    key = jax.random.PRNGKey(0)
    k_w, k_p, k_g = jax.random.split(key, 3)

    embedding_size = 32
    Lp, Lg = 8, 8

    atten_weight = init_atten_weight(k_w, embedding_size)
    w_padded = prepare_atten_weight(atten_weight)   # padded once, reused per call
    seq_p = jax.random.normal(k_p, (Lp, embedding_size), dtype=jnp.float32)
    seq_g = jax.random.normal(k_g, (Lg, embedding_size), dtype=jnp.float32)

    v_p, v_g = attention_forward(seq_p, seq_g, w_padded)
    jax.block_until_ready((v_p, v_g))

    # sanity check against pure-JAX reference (exact softmax normalization now,
    # so tolerances are tight f32 ones)
    ref_p, ref_g = reference_forward(seq_p, seq_g, atten_weight)
    np.testing.assert_allclose(np.asarray(v_p), np.asarray(ref_p), rtol=1e-5, atol=1e-5)
    np.testing.assert_allclose(np.asarray(v_g), np.asarray(ref_g), rtol=1e-5, atol=1e-5)

    print("KERNEL_OK")
</pallas_src>

<mosaic_0001>
module attributes {stable_mosaic.version = 11 : i64} {
  func.func @attention_kernel(%arg0: memref<8x128xf32, #tpu.memory_space<vmem>>, %arg1: memref<8x128xf32, #tpu.memory_space<vmem>>, %arg2: memref<128x8xf32, #tpu.memory_space<vmem>>, %arg3: memref<128x128xf32, #tpu.memory_space<vmem>>, %arg4: memref<8x128xf32, #tpu.memory_space<vmem>>) attributes {dimension_semantics = [], scalar_prefetch = 0 : i64, scratch_operands = 0 : i64, tpu.core_type = #tpu.core_type<tc>} {
    %c0 = arith.constant 0 : index
    %c0_0 = arith.constant 0 : index
    %0 = vector.load %arg0[%c0, %c0_0] : memref<8x128xf32, #tpu.memory_space<vmem>>, vector<8x128xf32>
    %c0_1 = arith.constant 0 : index
    %c0_2 = arith.constant 0 : index
    %1 = vector.load %arg1[%c0_1, %c0_2] : memref<8x128xf32, #tpu.memory_space<vmem>>, vector<8x128xf32>
    %c0_3 = arith.constant 0 : index
    %c0_4 = arith.constant 0 : index
    %2 = vector.load %arg2[%c0_3, %c0_4] : memref<128x8xf32, #tpu.memory_space<vmem>>, vector<128x8xf32>
    %c0_5 = arith.constant 0 : index
    %c0_6 = arith.constant 0 : index
    %3 = vector.load %arg3[%c0_5, %c0_6] : memref<128x128xf32, #tpu.memory_space<vmem>>, vector<128x128xf32>
    %cst = arith.constant dense<0.000000e+00> : vector<8x128xf32>
    %4 = tpu.matmul %0, %3, %cst {dimension_numbers = #tpu.dot_dimension_numbers<[1], [0], [0], [1], [0, 0, 1, 1], [], []>} : vector<8x128xf32>, vector<128x128xf32>, vector<8x128xf32> -> vector<8x128xf32>
    %cst_7 = arith.constant dense<0.000000e+00> : vector<8x8xf32>
    %5 = tpu.matmul %4, %2, %cst_7 {dimension_numbers = #tpu.dot_dimension_numbers<[1], [0], [0], [1], [0, 0, 1, 1], [], []>} : vector<8x128xf32>, vector<128x8xf32>, vector<8x8xf32> -> vector<8x8xf32>
    %6 = math.tanh %5 : vector<8x8xf32>
    %cst_8 = arith.constant dense<0xFF800000> : vector<8xf32>
    %7 = vector.multi_reduction <maximumf>, %6, %cst_8 [1] : vector<8x8xf32> to vector<8xf32>
    %8 = vector.shape_cast %7 : vector<8xf32> to vector<8x1xf32>
    %cst_9 = arith.constant dense<0xFF800000> : vector<1xf32>
    %9 = vector.multi_reduction <maximumf>, %8, %cst_9 [0] : vector<8x1xf32> to vector<1xf32>
    %10 = vector.shape_cast %9 : vector<1xf32> to vector<1x1xf32>
    %11 = vector.broadcast %10 : vector<1x1xf32> to vector<8x1xf32>
    %12 = arith.subf %8, %11 : vector<8x1xf32>
    %13 = math.exp %12 : vector<8x1xf32>
    %cst_10 = arith.constant dense<0.000000e+00> : vector<1xf32>
    %14 = vector.multi_reduction <add>, %13, %cst_10 [0] : vector<8x1xf32> to vector<1xf32>
    %15 = vector.shape_cast %14 : vector<1xf32> to vector<1x1xf32>
    %16 = vector.broadcast %15 : vector<1x1xf32> to vector<8x1xf32>
    %17 = arith.divf %13, %16 : vector<8x1xf32>
    %cst_11 = arith.constant dense<0xFF800000> : vector<8xf32>
    %18 = vector.multi_reduction <maximumf>, %6, %cst_11 [0] : vector<8x8xf32> to vector<8xf32>
    %19 = vector.shape_cast %18 : vector<8xf32> to vector<1x8xf32>
    %cst_12 = arith.constant dense<0xFF800000> : vector<1xf32>
    %20 = vector.multi_reduction <maximumf>, %19, %cst_12 [1] : vector<1x8xf32> to vector<1xf32>
    %21 = vector.shape_cast %20 : vector<1xf32> to vector<1x1xf32>
    %22 = vector.broadcast %21 : vector<1x1xf32> to vector<1x8xf32>
    %23 = arith.subf %19, %22 : vector<1x8xf32>
    %24 = math.exp %23 : vector<1x8xf32>
    %cst_13 = arith.constant dense<0.000000e+00> : vector<1xf32>
    %25 = vector.multi_reduction <add>, %24, %cst_13 [1] : vector<1x8xf32> to vector<1xf32>
    %26 = vector.shape_cast %25 : vector<1xf32> to vector<1x1xf32>
    %27 = vector.broadcast %26 : vector<1x1xf32> to vector<1x8xf32>
    %28 = arith.divf %24, %27 : vector<1x8xf32>
    %29 = tpu.iota {dimensions = array<i32: 0>} : vector<8x8xi32>
    %30 = tpu.iota {dimensions = array<i32: 1>} : vector<8x8xi32>
    %31 = arith.cmpi eq, %29, %30 : vector<8x8xi32>
    %cst_14 = arith.constant 0.000000e+00 : f32
    %32 = vector.shape_cast %28 : vector<1x8xf32> to vector<1x8xf32>
    %33 = vector.broadcast %32 : vector<1x8xf32> to vector<8x8xf32>
    %34 = vector.broadcast %cst_14 : f32 to vector<8x8xf32>
    %35 = arith.select %31, %33, %34 : vector<8x8xi1>, vector<8x8xf32>
    %cst_15 = arith.constant dense<0.000000e+00> : vector<8xf32>
    %36 = vector.multi_reduction <add>, %35, %cst_15 [1] : vector<8x8xf32> to vector<8xf32>
    %37 = vector.shape_cast %36 : vector<8xf32> to vector<8x1xf32>
    %38 = vector.broadcast %17 : vector<8x1xf32> to vector<8x128xf32>
    %39 = arith.mulf %38, %0 : vector<8x128xf32>
    %cst_16 = arith.constant dense<0.000000e+00> : vector<128xf32>
    %40 = vector.multi_reduction <add>, %39, %cst_16 [0] : vector<8x128xf32> to vector<128xf32>
    %41 = vector.shape_cast %40 : vector<128xf32> to vector<1x128xf32>
    %42 = vector.broadcast %37 : vector<8x1xf32> to vector<8x128xf32>
    %43 = arith.mulf %42, %1 : vector<8x128xf32>
    %cst_17 = arith.constant dense<0.000000e+00> : vector<128xf32>
    %44 = vector.multi_reduction <add>, %43, %cst_17 [0] : vector<8x128xf32> to vector<128xf32>
    %45 = vector.shape_cast %44 : vector<128xf32> to vector<1x128xf32>
    %46 = tpu.iota {dimensions = array<i32: 0>} : vector<8x128xi32>
    %c0_i32 = arith.constant 0 : i32
    %47 = vector.broadcast %c0_i32 : i32 to vector<8x128xi32>
    %48 = arith.cmpi eq, %46, %47 : vector<8x128xi32>
    %c1_i32 = arith.constant 1 : i32
    %49 = vector.broadcast %c1_i32 : i32 to vector<8x128xi32>
    %50 = arith.cmpi eq, %46, %49 : vector<8x128xi32>
    %cst_18 = arith.constant 0.000000e+00 : f32
    %51 = vector.shape_cast %45 : vector<1x128xf32> to vector<1x128xf32>
    %52 = vector.broadcast %51 : vector<1x128xf32> to vector<8x128xf32>
    %53 = vector.broadcast %cst_18 : f32 to vector<8x128xf32>
    %54 = arith.select %50, %52, %53 : vector<8x128xi1>, vector<8x128xf32>
    %55 = vector.shape_cast %41 : vector<1x128xf32> to vector<1x128xf32>
    %56 = vector.broadcast %55 : vector<1x128xf32> to vector<8x128xf32>
    %57 = arith.select %48, %56, %54 : vector<8x128xi1>, vector<8x128xf32>
    %c0_19 = arith.constant 0 : index
    %c0_20 = arith.constant 0 : index
    %58 = vector.load %arg4[%c0_19, %c0_20] : memref<8x128xf32, #tpu.memory_space<vmem>>, vector<8x128xf32>
    tpu.vector_store %arg4[%c0_19, %c0_20], %57 {strides = array<i32>} : memref<8x128xf32, #tpu.memory_space<vmem>>, vector<8x128xf32>,
    return
  }
}

</mosaic_0001>

<llo_original>
// kernel: attention_forward.1
$region0: #{attention_forward.1}
  #allocation0 [shape = 'u32[]', space=smem, size = 0x4, offset = 0x4, fixed_abs, tag = 'smem constant byte address 0x4 - core index']
  #allocation1 [shape = 'u32[144,128]{1,0:T(1,128)}', space=vmem, size = 0x12000, scoped, tag = 'internal scratch']
  %s0 = inlined_call_operand.vmem [shape: f32[8,128], index: 0, kind: input, shape index: {}]
  %s1 = inlined_call_operand.vmem [shape: f32[8,128], index: 1, kind: input, shape index: {}]
  %s2 = inlined_call_operand.vmem [shape: f32[128,8], index: 2, kind: input, shape index: {}]
  %s3 = inlined_call_operand.vmem [shape: f32[128,128], index: 3, kind: input, shape index: {}]
  %s4 = inlined_call_operand.vmem [shape: f32[8,128], index: 4, kind: output, shape index: {}]
  %s5 = sld [smem:[#allocation0]]
  $region26: #{attention_forward.1} parent=0
    _
  %s7 = ssub.s32 1, %s5
  %s8 = scalar_select 0, %s7, %s5
  // Predicated region
  $region2: #{attention_forward.1} parent=0 // pred_check
    _
  $region3: #{attention_forward.1} parent=0 // pred_check_branch
    %10 = sbr.rel (0) target = $region5
  $region4: #{attention_forward.1} parent=0 // pred_region
    _
  $region5: #{attention_forward.1} parent=0 // pred_fallthru
    _
  // Predicated region
  $region6: #{attention_forward.1} parent=0 // pred_check
    _
  $region7: #{attention_forward.1} parent=0 // pred_check_branch
    %12 = sbr.rel (0) target = $region9
  $region8: #{attention_forward.1} parent=0 // pred_region
    _
  $region9: #{attention_forward.1} parent=0 // pred_fallthru
    _
  // Predicated region
  $region10: #{attention_forward.1} parent=0 // pred_check
    _
  $region11: #{attention_forward.1} parent=0 // pred_check_branch
    %14 = sbr.rel (0) target = $region13
  $region12: #{attention_forward.1} parent=0 // pred_region
    _
  $region13: #{attention_forward.1} parent=0 // pred_fallthru
    _
  // Predicated region
  $region14: #{attention_forward.1} parent=0 // pred_check
    _
  $region15: #{attention_forward.1} parent=0 // pred_check_branch
    %16 = sbr.rel (0) target = $region17
  $region16: #{attention_forward.1} parent=0 // pred_region
    _
  $region17: #{attention_forward.1} parent=0 // pred_fallthru
    _
  %v17 = vld [vmem:[%s0] sm:$0xff]
  %v18 = vld [vmem:[%s1] sm:$0xff]
  %v19 = vld [vmem:[%s2] sm:$0xff]
  %v20 = vld [vmem:[%s2 + $0x8] sm:$0xff]
  %v21 = vld [vmem:[%s2 + $0x10] sm:$0xff]
  %v22 = vld [vmem:[%s2 + $0x18] sm:$0xff]
  %v23 = vld [vmem:[%s2 + $0x20] sm:$0xff]
  %v24 = vld [vmem:[%s2 + $0x28] sm:$0xff]
  %v25 = vld [vmem:[%s2 + $0x30] sm:$0xff]
  %v26 = vld [vmem:[%s2 + $0x38] sm:$0xff]
  %v27 = vld [vmem:[%s2 + $0x40] sm:$0xff]
  %v28 = vld [vmem:[%s2 + $0x48] sm:$0xff]
  %v29 = vld [vmem:[%s2 + $0x50] sm:$0xff]
  %v30 = vld [vmem:[%s2 + $0x58] sm:$0xff]
  %v31 = vld [vmem:[%s2 + $0x60] sm:$0xff]
  %v32 = vld [vmem:[%s2 + $0x68] sm:$0xff]
  %v33 = vld [vmem:[%s2 + $0x70] sm:$0xff]
  %v34 = vld [vmem:[%s2 + $0x78] sm:$0xff]
  %v35 = vld [vmem:[%s3] sm:$0xff]
  %v36 = vld [vmem:[%s3 + $0x8] sm:$0xff]
  %v37 = vld [vmem:[%s3 + $0x10] sm:$0xff]
  %v38 = vld [vmem:[%s3 + $0x18] sm:$0xff]
  %v39 = vld [vmem:[%s3 + $0x20] sm:$0xff]
  %v40 = vld [vmem:[%s3 + $0x28] sm:$0xff]
  %v41 = vld [vmem:[%s3 + $0x30] sm:$0xff]
  %v42 = vld [vmem:[%s3 + $0x38] sm:$0xff]
  %v43 = vld [vmem:[%s3 + $0x40] sm:$0xff]
  %v44 = vld [vmem:[%s3 + $0x48] sm:$0xff]
  %v45 = vld [vmem:[%s3 + $0x50] sm:$0xff]
  %v46 = vld [vmem:[%s3 + $0x58] sm:$0xff]
  %v47 = vld [vmem:[%s3 + $0x60] sm:$0xff]
  %v48 = vld [vmem:[%s3 + $0x68] sm:$0xff]
  %v49 = vld [vmem:[%s3 + $0x70] sm:$0xff]
  %v50 = vld [vmem:[%s3 + $0x78] sm:$0xff]
  %51 = vmatprep.subr.mxu0 0.0
  %52 = vmatpush1.msra.mxu0 %v35
  %53 = vmatprep.subr.mxu0 0.0
  %54 = vmatpush1.msra.mxu0 %v36
  %55 = vmatprep.subr.mxu0 0.0
  %56 = vmatpush1.msra.mxu0 %v37
  %57 = vmatprep.subr.mxu0 0.0
  %58 = vmatpush1.msra.mxu0 %v38
  %59 = vmatprep.subr.mxu0 0.0
  %60 = vmatpush1.msra.mxu0 %v39
  %61 = vmatprep.subr.mxu0 0.0
  %62 = vmatpush1.msra.mxu0 %v40
  %63 = vmatprep.subr.mxu0 0.0
  %64 = vmatpush1.msra.mxu0 %v41
  %65 = vmatprep.subr.mxu0 0.0
  %66 = vmatpush1.msra.mxu0 %v42
  %67 = vmatprep.subr.mxu0 0.0
  %68 = vmatpush1.msra.mxu0 %v43
  %69 = vmatprep.subr.mxu0 0.0
  %70 = vmatpush1.msra.mxu0 %v44
  %71 = vmatprep.subr.mxu0 0.0
  %72 = vmatpush1.msra.mxu0 %v45
  %73 = vmatprep.subr.mxu0 0.0
  %74 = vmatpush1.msra.mxu0 %v46
  %75 = vmatprep.subr.mxu0 0.0
  %76 = vmatpush1.msra.mxu0 %v47
  %77 = vmatprep.subr.mxu0 0.0
  %78 = vmatpush1.msra.mxu0 %v48
  %79 = vmatprep.subr.mxu0 0.0
  %80 = vmatpush1.msra.mxu0 %v49
  %81 = vmatprep.subr.mxu0 0.0
  %82 = vmatpush1.msra.mxu0 %v50
  %83 = vmatprep.subr.mxu0 0.0
  %84 = vmatpush1.msra.mxu0 0.0
  %85 = vmatprep.subr.mxu0 0.0
  %86 = vmatpush1.msra.mxu0 0.0
  %87 = vmatprep.subr.mxu0 0.0
  %88 = vmatpush1.msra.mxu0 0.0
  %89 = vmatprep.subr.mxu0 0.0
  %90 = vmatpush1.msra.mxu0 0.0
  %91 = vmatprep.subr.mxu0 0.0
  %92 = vmatpush1.msra.mxu0 0.0
  %93 = vmatprep.subr.mxu0 0.0
  %94 = vmatpush1.msra.mxu0 0.0
  %95 = vmatprep.subr.mxu0 0.0
  %96 = vmatpush1.msra.mxu0 0.0
  %97 = vmatprep.subr.mxu0 0.0
  %98 = vmatpush1.msra.mxu0 0.0
  %99 = vmatprep.subr.mxu0 0.0
  %100 = vmatpush1.msra.mxu0 0.0
  %101 = vmatprep.subr.mxu0 0.0
  %102 = vmatpush1.msra.mxu0 0.0
  %103 = vmatprep.subr.mxu0 0.0
  %104 = vmatpush1.msra.mxu0 0.0
  %105 = vmatprep.subr.mxu0 0.0
  %106 = vmatpush1.msra.mxu0 0.0
  %107 = vmatprep.subr.mxu0 0.0
  %108 = vmatpush1.msra.mxu0 0.0
  %109 = vmatprep.subr.mxu0 0.0
  %110 = vmatpush1.msra.mxu0 0.0
  %111 = vmatprep.subr.mxu0 0.0
  %112 = vmatpush1.msra.mxu0 0.0
  %113 = vmatprep.subr.mxu0 0.0
  %114 = vmatpush1.msra.mxu0 0.0
  %115 = vmatprep.mubr.f32.mxu0 0.0
  %116 = vmatmul.mubr.f32.gmra.mrb[0].mxu0 %v17
  %v117 = vpop.f32.mrb[0].mxu0
  %v118 = vadd.f32 0.0, %v117
  %v119 = vpop.f32.mrb[0].mxu0
  %120 = vdwg.mxu0
  %121 = vmatprep.subr.mxu0 0.0
  %122 = vmatpush1.msra.mxu0 %v19
  %123 = vmatprep.subr.mxu0 0.0
  %124 = vmatpush1.msra.mxu0 %v20
  %125 = vmatprep.subr.mxu0 0.0
  %126 = vmatpush1.msra.mxu0 %v21
  %127 = vmatprep.subr.mxu0 0.0
  %128 = vmatpush1.msra.mxu0 %v22
  %129 = vmatprep.subr.mxu0 0.0
  %130 = vmatpush1.msra.mxu0 %v23
  %131 = vmatprep.subr.mxu0 0.0
  %132 = vmatpush1.msra.mxu0 %v24
  %133 = vmatprep.subr.mxu0 0.0
  %134 = vmatpush1.msra.mxu0 %v25
  %135 = vmatprep.subr.mxu0 0.0
  %136 = vmatpush1.msra.mxu0 %v26
  %137 = vmatprep.subr.mxu0 0.0
  %138 = vmatpush1.msra.mxu0 %v27
  %139 = vmatprep.subr.mxu0 0.0
  %140 = vmatpush1.msra.mxu0 %v28
  %141 = vmatprep.subr.mxu0 0.0
  %142 = vmatpush1.msra.mxu0 %v29
  %143 = vmatprep.subr.mxu0 0.0
  %144 = vmatpush1.msra.mxu0 %v30
  %145 = vmatprep.subr.mxu0 0.0
  %146 = vmatpush1.msra.mxu0 %v31
  %147 = vmatprep.subr.mxu0 0.0
  %148 = vmatpush1.msra.mxu0 %v32
  %149 = vmatprep.subr.mxu0 0.0
  %150 = vmatpush1.msra.mxu0 %v33
  %151 = vmatprep.subr.mxu0 0.0
  %152 = vmatpush1.msra.mxu0 %v34
  %153 = vmatprep.subr.mxu0 0.0
  %154 = vmatpush1.msra.mxu0 0.0
  %155 = vmatprep.subr.mxu0 0.0
  %156 = vmatpush1.msra.mxu0 0.0
  %157 = vmatprep.subr.mxu0 0.0
  %158 = vmatpush1.msra.mxu0 0.0
  %159 = vmatprep.subr.mxu0 0.0
  %160 = vmatpush1.msra.mxu0 0.0
  %161 = vmatprep.subr.mxu0 0.0
  %162 = vmatpush1.msra.mxu0 0.0
  %163 = vmatprep.subr.mxu0 0.0
  %164 = vmatpush1.msra.mxu0 0.0
  %165 = vmatprep.subr.mxu0 0.0
  %166 = vmatpush1.msra.mxu0 0.0
  %167 = vmatprep.subr.mxu0 0.0
  %168 = vmatpush1.msra.mxu0 0.0
  %169 = vmatprep.subr.mxu0 0.0
  %170 = vmatpush1.msra.mxu0 0.0
  %171 = vmatprep.subr.mxu0 0.0
  %172 = vmatpush1.msra.mxu0 0.0
  %173 = vmatprep.subr.mxu0 0.0
  %174 = vmatpush1.msra.mxu0 0.0
  %175 = vmatprep.subr.mxu0 0.0
  %176 = vmatpush1.msra.mxu0 0.0
  %177 = vmatprep.subr.mxu0 0.0
  %178 = vmatpush1.msra.mxu0 0.0
  %179 = vmatprep.subr.mxu0 0.0
  %180 = vmatpush1.msra.mxu0 0.0
  %181 = vmatprep.subr.mxu0 0.0
  %182 = vmatpush1.msra.mxu0 0.0
  %183 = vmatprep.subr.mxu0 0.0
  %184 = vmatpush1.msra.mxu0 0.0
  %185 = vmatprep.mubr.f32.mxu0 0.0
  %186 = vmatmul.mubr.f32.gmra.mrb[0].mxu0 %v118
  %v187 = vpop.f32.mrb[0].mxu0
  %v188 = vadd.f32 0.0, %v187
  %v189 = vpop.f32.mrb[0].mxu0
  %190 = vdwg.mxu0
  %v191 = vtanh.pop %v188
  %vm192 = vcmask 64512
  %v193 = vsel %vm192, %v191, -inf
  %194 = vmax.xlane.f32.xlu0 %v193
  %v195 = vpop.xlane.xlu0 %194
  %v196 = vrot.slane %v195, 4
  %v197 = vmax.f32 %v195, %v196
  %v198 = vrot.slane %v197, 2
  %v199 = vmax.f32 %v197, %v198
  %v200 = vrot.slane %v199, 1
  %v201 = vmax.f32 %v199, %v200
  %v202 = vsub.f32 %v195, %v201
  %v203 = vmul.f32 %v202, 1.442695
  %v204 = vpow.pop %v203
  %v205 = vrot.slane %v204, 4
  %v206 = vadd.f32 %v204, %v205
  %v207 = vrot.slane %v206, 2
  %v208 = vadd.f32 %v206, %v207
  %v209 = vrot.slane %v208, 1
  %v210 = vadd.f32 %v208, %v209
  %v211 = vrcp.pop %v210
  %v212 = vmul.f32 %v204, %v211
  %v213 = vrot.slane %v193, 4
  %v214 = vmax.f32 %v193, %v213
  %v215 = vrot.slane %v214, 2
  %v216 = vmax.f32 %v214, %v215
  %v217 = vrot.slane %v216, 1
  %v218 = vmax.f32 %v216, %v217
  %v219 = vsel %vm192, %v218, -inf
  %220 = vmax.xlane.f32.xlu0 %v219
  %v221 = vpop.xlane.xlu0 %220
  %v222 = vsub.f32 %v218, %v221
  %v223 = vmul.f32 %v222, 1.442695
  %v224 = vpow.pop %v223
  %v225 = vsel %vm192, %v224, 0.0
  %226 = vadd.xlane.f32.xlu0 %v225
  %v227 = vpop.xlane.xlu0 %226
  %v228 = vrcp.pop %v227
  %v229 = vmul.f32 %v224, %v228
  %v230 = vlaneseq
  %v231 = vshrl.u32 %v230, 7
  %v232 = vlaneseq
  %v233 = vand.u32 %v232, 127
  %vm234 = vcmp.eq.s32.totalorder %v231, %v233
  %v235 = vsel %vm234, %v229, 0.0
  %v236 = vsel %vm192, %v235, 0.0
  %237 = vadd.xlane.f32.xlu0 %v236
  %v238 = vpop.xlane.xlu0 %237
  %v239 = vmul.f32 %v212, %v17
  %v240 = vrot.slane %v239, 4
  %v241 = vadd.f32 %v239, %v240
  %v242 = vrot.slane %v241, 2
  %v243 = vadd.f32 %v241, %v242
  %v244 = vrot.slane %v243, 1
  %v245 = vadd.f32 %v243, %v244
  %v246 = vmul.f32 %v238, %v18
  %v247 = vrot.slane %v246, 4
  %v248 = vadd.f32 %v246, %v247
  %v249 = vrot.slane %v248, 2
  %v250 = vadd.f32 %v248, %v249
  %v251 = vrot.slane %v250, 1
  %v252 = vadd.f32 %v250, %v251
  %vm253 = vcmp.eq.s32.totalorder %v231, 0
  %vm254 = vcmp.eq.s32.totalorder %v231, 1
  %v255 = vsel %vm254, %v252, 0.0
  %v256 = vsel %vm253, %v245, %v255
  %257 = vst [vmem:[%s4] sm:$0xff] %v256
  // Predicated region
  $region18: #{attention_forward.1} parent=0 // pred_check
    _
  $region19: #{attention_forward.1} parent=0 // pred_check_branch
    %259 = sbr.rel (0) target = $region21
  $region20: #{attention_forward.1} parent=0 // pred_region
    _
  $region21: #{attention_forward.1} parent=0 // pred_fallthru
    _
  // Predicated region
  $region22: #{attention_forward.1} parent=0 // pred_check
    _
  $region23: #{attention_forward.1} parent=0 // pred_check_branch
    %261 = sbr.rel (0) target = $region25
  $region24: #{attention_forward.1} parent=0 // pred_region
    _
  $region25: #{attention_forward.1} parent=0 // pred_fallthru
    _

</llo_original>
